<compile_context>
chip_gen: v7x
topology: tpu7x:2x2x1
jax: 0.10.0
libtpu: 0.0.40
codegen_flags: <defaults>
</compile_context>

<pallas_src>
import functools

import jax
import jax.numpy as jnp
from jax.experimental import pallas as pl
from jax.experimental.pallas import tpu as pltpu


def conv3x3_kernel(w_ref, x_ref, o_ref, *, H, W):
    """3x3 conv, C_in = C_out = 1, stride 1, zero padding, flattened layout.

    w_ref : SMEM (10,)      -- 9 taps (row-major) followed by the bias
    x_ref : VMEM (N, H*W)   -- input image, rows flattened into the lane dim
    o_ref : VMEM (N, H*W)   -- output, same flattened lane-dense layout
    """
    N, HW = o_ref.shape

    # Pull taps + bias into scalar registers once, before the vector work.
    taps = [w_ref[i] for i in range(9)]
    bias = w_ref[9]

    # Single vector load of the image; everything else stays in vregs.
    x = x_ref[...].astype(jnp.float32)

    # Flat-position iota (0..H*W-1 per image) -> halo masks. Row tests are plain
    # flat-index comparisons; the column index needs no division when W is 2^k.
    pos = jax.lax.broadcasted_iota(jnp.int32, (N, HW), 1)
    if (W & (W - 1)) == 0:
        col = jnp.bitwise_and(pos, W - 1)
    else:
        col = jax.lax.rem(pos, W)

    row_ok = {-1: pos >= W, 0: None, 1: pos < HW - W}        # 0 <= i+di < H
    col_ok = {-1: col >= 1, 0: None, 1: col < W - 1}         # 0 <= j+dj < W

    # Unrolled 9-tap MAC chain on the VPU; shifts come from the XLU via roll.
    acc = jnp.zeros((N, HW), dtype=jnp.float32)
    for di in (-1, 0, 1):
        for dj in (-1, 0, 1):
            tap = taps[(di + 1) * 3 + (dj + 1)]
            s = di * W + dj                                   # flat tap offset
            # shifted[p] = x[p + s]  (cyclic; wrap positions get masked to 0)
            v = x if s == 0 else pltpu.roll(x, (-s) % HW, axis=1)
            rm, cm = row_ok[di], col_ok[dj]
            if rm is not None and cm is not None:
                m = jnp.logical_and(rm, cm)
            else:
                m = rm if rm is not None else cm
            if m is not None:
                v = jnp.where(m, v, 0.0)
            acc = acc + tap * v

    o_ref[...] = (acc + bias).astype(o_ref.dtype)


def conv2d_1x1ch_3x3(x_nchw, weight, bias):
    """x_nchw: (N, 1, H, W); weight: (1, 1, 3, 3); bias: (1,). Returns (N, 1, H, W)."""
    N, C, H, W = x_nchw.shape
    assert C == 1, "TestModel's Conv2d has a single input channel"
    HW = H * W

    w_flat = jnp.concatenate(
        [weight.reshape(9), bias.reshape(1)]).astype(jnp.float32)   # (10,)
    x_flat = x_nchw.reshape(N, HW)                                   # lane-dense

    itemsize = jnp.dtype(x_nchw.dtype).itemsize
    cost = pl.CostEstimate(
        flops=2 * 9 * N * HW + N * HW,
        transcendentals=0,
        bytes_accessed=2 * N * HW * itemsize + 10 * 4,
    )

    out_flat = pl.pallas_call(
        functools.partial(conv3x3_kernel, H=H, W=W),
        out_shape=jax.ShapeDtypeStruct((N, HW), x_nchw.dtype),
        in_specs=[
            pl.BlockSpec(memory_space=pltpu.MemorySpace.SMEM),   # taps + bias
            pl.BlockSpec(memory_space=pltpu.MemorySpace.VMEM),   # flattened image
        ],
        out_specs=pl.BlockSpec(memory_space=pltpu.MemorySpace.VMEM),
        cost_estimate=cost,
    )(w_flat, x_flat)

    return out_flat.reshape(N, 1, H, W)


def reference_conv(x_nchw, weight, bias):
    """Plain-JAX reference (matches torch.nn.Conv2d(1, 1, 3, 1, padding=1))."""
    return jax.lax.conv_general_dilated(
        x_nchw, weight,
        window_strides=(1, 1), padding=((1, 1), (1, 1)),
        dimension_numbers=("NCHW", "OIHW", "NCHW"),
    ) + bias.reshape(1, 1, 1, 1)


if __name__ == "__main__":
    key = jax.random.PRNGKey(0)
    k_x, k_w, k_b = jax.random.split(key, 3)

    N, C, H, W = 2, 1, 16, 16
    x = jax.random.normal(k_x, (N, C, H, W), dtype=jnp.float32)

    # Deterministic Conv2d(1, 1, 3) params: uniform(-1/sqrt(fan_in), 1/sqrt(fan_in)),
    # fan_in = 1 * 3 * 3 = 9, mimicking PyTorch's default init.
    bound = 1.0 / 3.0
    weight = jax.random.uniform(k_w, (1, 1, 3, 3), jnp.float32, -bound, bound)
    bias = jax.random.uniform(k_b, (1,), jnp.float32, -bound, bound)

    out = conv2d_1x1ch_3x3(x, weight, bias)
    out = jax.block_until_ready(out)

    ref = reference_conv(x, weight, bias)
    assert out.shape == (N, C, H, W)
    assert jnp.allclose(out, ref, atol=1e-5, rtol=1e-5), "mismatch vs reference"

    print("KERNEL_OK")
</pallas_src>

<mosaic_0001>
module attributes {stable_mosaic.version = 11 : i64} {
  func.func @conv3x3_kernel(%arg0: memref<10xf32, #tpu.memory_space<smem>>, %arg1: memref<2x256xf32, #tpu.memory_space<vmem>>, %arg2: memref<2x256xf32, #tpu.memory_space<vmem>>) attributes {dimension_semantics = [], scalar_prefetch = 0 : i64, scratch_operands = 0 : i64, tpu.core_type = #tpu.core_type<tc>} {
    %c0 = arith.constant 0 : index
    %0 = memref.load %arg0[%c0] : memref<10xf32, #tpu.memory_space<smem>>
    %c1 = arith.constant 1 : index
    %1 = memref.load %arg0[%c1] : memref<10xf32, #tpu.memory_space<smem>>
    %c2 = arith.constant 2 : index
    %2 = memref.load %arg0[%c2] : memref<10xf32, #tpu.memory_space<smem>>
    %c3 = arith.constant 3 : index
    %3 = memref.load %arg0[%c3] : memref<10xf32, #tpu.memory_space<smem>>
    %c4 = arith.constant 4 : index
    %4 = memref.load %arg0[%c4] : memref<10xf32, #tpu.memory_space<smem>>
    %c5 = arith.constant 5 : index
    %5 = memref.load %arg0[%c5] : memref<10xf32, #tpu.memory_space<smem>>
    %c6 = arith.constant 6 : index
    %6 = memref.load %arg0[%c6] : memref<10xf32, #tpu.memory_space<smem>>
    %c7 = arith.constant 7 : index
    %7 = memref.load %arg0[%c7] : memref<10xf32, #tpu.memory_space<smem>>
    %c8 = arith.constant 8 : index
    %8 = memref.load %arg0[%c8] : memref<10xf32, #tpu.memory_space<smem>>
    %c9 = arith.constant 9 : index
    %9 = memref.load %arg0[%c9] : memref<10xf32, #tpu.memory_space<smem>>
    %c0_0 = arith.constant 0 : index
    %c0_1 = arith.constant 0 : index
    %10 = vector.load %arg1[%c0_0, %c0_1] : memref<2x256xf32, #tpu.memory_space<vmem>>, vector<2x256xf32>
    %11 = tpu.iota {dimensions = array<i32: 1>} : vector<2x256xi32>
    %c15_i32 = arith.constant 15 : i32
    %12 = vector.broadcast %c15_i32 : i32 to vector<2x256xi32>
    %13 = arith.andi %11, %12 : vector<2x256xi32>
    %c16_i32 = arith.constant 16 : i32
    %14 = vector.broadcast %c16_i32 : i32 to vector<2x256xi32>
    %15 = arith.cmpi sge, %11, %14 : vector<2x256xi32>
    %c240_i32 = arith.constant 240 : i32
    %16 = vector.broadcast %c240_i32 : i32 to vector<2x256xi32>
    %17 = arith.cmpi slt, %11, %16 : vector<2x256xi32>
    %c1_i32 = arith.constant 1 : i32
    %18 = vector.broadcast %c1_i32 : i32 to vector<2x256xi32>
    %19 = arith.cmpi sge, %13, %18 : vector<2x256xi32>
    %c15_i32_2 = arith.constant 15 : i32
    %20 = vector.broadcast %c15_i32_2 : i32 to vector<2x256xi32>
    %21 = arith.cmpi slt, %13, %20 : vector<2x256xi32>
    %cst = arith.constant 0.000000e+00 : f32
    %22 = vector.broadcast %cst : f32 to vector<2x256xf32>
    %c17_i32 = arith.constant 17 : i32
    %23 = tpu.dynamic_rotate %10 by %c17_i32 dim 1 : vector<2x256xf32>, i32 -> vector<2x256xf32>
    %24 = arith.andi %15, %19 : vector<2x256xi1>
    %cst_3 = arith.constant 0.000000e+00 : f32
    %25 = vector.broadcast %cst_3 : f32 to vector<2x256xf32>
    %26 = arith.select %24, %23, %25 : vector<2x256xi1>, vector<2x256xf32>
    %27 = vector.broadcast %0 : f32 to vector<2x256xf32>
    %28 = arith.mulf %27, %26 : vector<2x256xf32>
    %29 = arith.addf %22, %28 : vector<2x256xf32>
    %c16_i32_4 = arith.constant 16 : i32
    %30 = tpu.dynamic_rotate %10 by %c16_i32_4 dim 1 : vector<2x256xf32>, i32 -> vector<2x256xf32>
    %cst_5 = arith.constant 0.000000e+00 : f32
    %31 = vector.broadcast %cst_5 : f32 to vector<2x256xf32>
    %32 = arith.select %15, %30, %31 : vector<2x256xi1>, vector<2x256xf32>
    %33 = vector.broadcast %1 : f32 to vector<2x256xf32>
    %34 = arith.mulf %33, %32 : vector<2x256xf32>
    %35 = arith.addf %29, %34 : vector<2x256xf32>
    %c15_i32_6 = arith.constant 15 : i32
    %36 = tpu.dynamic_rotate %10 by %c15_i32_6 dim 1 : vector<2x256xf32>, i32 -> vector<2x256xf32>
    %37 = arith.andi %15, %21 : vector<2x256xi1>
    %cst_7 = arith.constant 0.000000e+00 : f32
    %38 = vector.broadcast %cst_7 : f32 to vector<2x256xf32>
    %39 = arith.select %37, %36, %38 : vector<2x256xi1>, vector<2x256xf32>
    %40 = vector.broadcast %2 : f32 to vector<2x256xf32>
    %41 = arith.mulf %40, %39 : vector<2x256xf32>
    %42 = arith.addf %35, %41 : vector<2x256xf32>
    %c1_i32_8 = arith.constant 1 : i32
    %43 = tpu.dynamic_rotate %10 by %c1_i32_8 dim 1 : vector<2x256xf32>, i32 -> vector<2x256xf32>
    %cst_9 = arith.constant 0.000000e+00 : f32
    %44 = vector.broadcast %cst_9 : f32 to vector<2x256xf32>
    %45 = arith.select %19, %43, %44 : vector<2x256xi1>, vector<2x256xf32>
    %46 = vector.broadcast %3 : f32 to vector<2x256xf32>
    %47 = arith.mulf %46, %45 : vector<2x256xf32>
    %48 = arith.addf %42, %47 : vector<2x256xf32>
    %49 = vector.broadcast %4 : f32 to vector<2x256xf32>
    %50 = arith.mulf %49, %10 : vector<2x256xf32>
    %51 = arith.addf %48, %50 : vector<2x256xf32>
    %c255_i32 = arith.constant 255 : i32
    %52 = tpu.dynamic_rotate %10 by %c255_i32 dim 1 : vector<2x256xf32>, i32 -> vector<2x256xf32>
    %cst_10 = arith.constant 0.000000e+00 : f32
    %53 = vector.broadcast %cst_10 : f32 to vector<2x256xf32>
    %54 = arith.select %21, %52, %53 : vector<2x256xi1>, vector<2x256xf32>
    %55 = vector.broadcast %5 : f32 to vector<2x256xf32>
    %56 = arith.mulf %55, %54 : vector<2x256xf32>
    %57 = arith.addf %51, %56 : vector<2x256xf32>
    %c241_i32 = arith.constant 241 : i32
    %58 = tpu.dynamic_rotate %10 by %c241_i32 dim 1 : vector<2x256xf32>, i32 -> vector<2x256xf32>
    %59 = arith.andi %17, %19 : vector<2x256xi1>
    %cst_11 = arith.constant 0.000000e+00 : f32
    %60 = vector.broadcast %cst_11 : f32 to vector<2x256xf32>
    %61 = arith.select %59, %58, %60 : vector<2x256xi1>, vector<2x256xf32>
    %62 = vector.broadcast %6 : f32 to vector<2x256xf32>
    %63 = arith.mulf %62, %61 : vector<2x256xf32>
    %64 = arith.addf %57, %63 : vector<2x256xf32>
    %c240_i32_12 = arith.constant 240 : i32
    %65 = tpu.dynamic_rotate %10 by %c240_i32_12 dim 1 : vector<2x256xf32>, i32 -> vector<2x256xf32>
    %cst_13 = arith.constant 0.000000e+00 : f32
    %66 = vector.broadcast %cst_13 : f32 to vector<2x256xf32>
    %67 = arith.select %17, %65, %66 : vector<2x256xi1>, vector<2x256xf32>
    %68 = vector.broadcast %7 : f32 to vector<2x256xf32>
    %69 = arith.mulf %68, %67 : vector<2x256xf32>
    %70 = arith.addf %64, %69 : vector<2x256xf32>
    %c239_i32 = arith.constant 239 : i32
    %71 = tpu.dynamic_rotate %10 by %c239_i32 dim 1 : vector<2x256xf32>, i32 -> vector<2x256xf32>
    %72 = arith.andi %17, %21 : vector<2x256xi1>
    %cst_14 = arith.constant 0.000000e+00 : f32
    %73 = vector.broadcast %cst_14 : f32 to vector<2x256xf32>
    %74 = arith.select %72, %71, %73 : vector<2x256xi1>, vector<2x256xf32>
    %75 = vector.broadcast %8 : f32 to vector<2x256xf32>
    %76 = arith.mulf %75, %74 : vector<2x256xf32>
    %77 = arith.addf %70, %76 : vector<2x256xf32>
    %78 = vector.broadcast %9 : f32 to vector<2x256xf32>
    %79 = arith.addf %77, %78 : vector<2x256xf32>
    %c0_15 = arith.constant 0 : index
    %c0_16 = arith.constant 0 : index
    %80 = vector.load %arg2[%c0_15, %c0_16] : memref<2x256xf32, #tpu.memory_space<vmem>>, vector<2x256xf32>
    tpu.vector_store %arg2[%c0_15, %c0_16], %79 {strides = array<i32>} : memref<2x256xf32, #tpu.memory_space<vmem>>, vector<2x256xf32>,
    return
  }
}

</mosaic_0001>

<llo_original>
// kernel: tpu_custom_call.1
$region0: #{tpu_custom_call.1}
  #allocation0 [shape = 'u32[]', space=smem, size = 0x4, offset = 0x4, fixed_abs, tag = 'smem constant byte address 0x4 - core index']
  #allocation1 [shape = 'u32[144,128]{1,0:T(1,128)}', space=vmem, size = 0x12000, scoped, tag = 'internal scratch']
  %s0 = inlined_call_operand.hbm [shape: f32[10], index: 0, kind: input, shape index: {}]
  %s1 = inlined_call_operand.hbm [shape: f32[2,256], index: 1, kind: input, shape index: {}]
  %s2 = inlined_call_operand.hbm [shape: f32[2,256], index: 2, kind: output, shape index: {}]
  %s3 = sld [smem:[#allocation0]]
  $region26: #{tpu_custom_call.1} parent=0
    _
  %s5 = ssub.s32 1, %s3
  %s6 = scalar_select 0, %s5, %s3
  $region1: #{tpu_custom_call.1} parent=0
    #allocation2 [shape = 'u8[512]{0}', space=smem, size = 0x200, scoped, tag = 'input window, operand 0, single buffered']
    #allocation3 [shape = 's32[1]{0}', space=sflag, size = 0x4, scoped, tag = 'scoped memory for tpu_custom_call.1']
    #allocation4 [shape = 's32[1]{0}', space=sflag, size = 0x4, scoped, tag = 'scoped memory for tpu_custom_call.1']
    #allocation5 [shape = 's32[1]{0}', space=sflag, size = 0x4, scoped, tag = 'scoped memory for tpu_custom_call.1']
    #allocation6 [shape = 'u8[2048]{0}', space=vmem, size = 0x800, scoped, tag = 'input window, operand 1, single buffered']
    #allocation7 [shape = 'u8[2048]{0}', space=vmem, size = 0x800, scoped, tag = 'output window, operand 0, single buffered']
    %7 = vsyncpa [#allocation5], 0
    %8 = vsyncpa [#allocation3], 0
    %9 = vsyncpa [#allocation4], 0
    // Predicated region
    $region2: #{tpu_custom_call.1} parent=1 // pred_check
      _
    $region3: #{tpu_custom_call.1} parent=1 // pred_check_branch
      %11 = sbr.rel (0) target = $region5
    $region4: #{tpu_custom_call.1} parent=1 // pred_region
      %s13 = ssub.s32 16, 16
      %14 = vsyncadd [#allocation5], %s13
      %17 = dma.hbm_to_smem %s0, 16, [#allocation2], [#allocation5]
    $region5: #{tpu_custom_call.1} parent=1 // pred_fallthru
      _
    // Predicated region
    $region6: #{tpu_custom_call.1} parent=1 // pred_check
      _
    $region7: #{tpu_custom_call.1} parent=1 // pred_check_branch
      %19 = sbr.rel (0) target = $region9
    $region8: #{tpu_custom_call.1} parent=1 // pred_region
      %s21 = ssub.s32 64, 64
      %22 = vsyncadd [#allocation3], %s21
      %s24 = sshll.u32 [#allocation6], 4
      %s25 = int_to_ptr.vmem [resolvable:$true] %s24
      %27 = dma.hbm_to_vmem [thread:$0]  %s1, 64, %s25, [#allocation3]
    $region9: #{tpu_custom_call.1} parent=1 // pred_fallthru
      _
    // Predicated region
    $region10: #{tpu_custom_call.1} parent=1 // pred_check
      _
    $region11: #{tpu_custom_call.1} parent=1 // pred_check_branch
      %29 = sbr.rel (0) target = $region13
    $region12: #{tpu_custom_call.1} parent=1 // pred_region
      %30 = dma.done [#allocation5], 16
    $region13: #{tpu_custom_call.1} parent=1 // pred_fallthru
      _
    // Predicated region
    $region14: #{tpu_custom_call.1} parent=1 // pred_check
      _
    $region15: #{tpu_custom_call.1} parent=1 // pred_check_branch
      %32 = sbr.rel (0) target = $region17
    $region16: #{tpu_custom_call.1} parent=1 // pred_region
      %33 = dma.done [#allocation3], 64
    $region17: #{tpu_custom_call.1} parent=1 // pred_fallthru
      _
    %34 = sfence
    %s35 = sld [smem:[#allocation2]]
    %s36 = sld [smem:[#allocation2 + $0x1]]
    %s37 = sld [smem:[#allocation2 + $0x2]]
    %s38 = sld [smem:[#allocation2 + $0x3]]
    %s39 = sld [smem:[#allocation2 + $0x4]]
    %s40 = sld [smem:[#allocation2 + $0x5]]
    %s41 = sld [smem:[#allocation2 + $0x6]]
    %s42 = sld [smem:[#allocation2 + $0x7]]
    %s43 = sld [smem:[#allocation2 + $0x8]]
    %s44 = sld [smem:[#allocation2 + $0x9]]
    %v45 = vld [vmem:[#allocation6] sm:$0xf]
    %v46 = vlaneseq
    %v47 = vand.u32 %v46, 127
    %v48 = vadd.s32 %v47, 128
    %v49 = vand.u32 %v47, 15
    %v50 = vand.u32 %v48, 15
    %vm51 = vcmp.ge.s32.totalorder %v47, 16
    %vm52 = vcmp.ge.s32.totalorder %v48, 16
    %vm53 = vcmp.lt.s32.totalorder %v47, 240
    %vm54 = vcmp.lt.s32.totalorder %v48, 240
    %vm55 = vcmp.ge.s32.totalorder %v49, 1
    %vm56 = vcmp.ge.s32.totalorder %v50, 1
    %vm57 = vcmp.lt.s32.totalorder %v49, 15
    %vm58 = vcmp.lt.s32.totalorder %v50, 15
    %v61 = vunpack.c.l.s4 1983009808
    %v62 = vunpack.c.0.s8 %v61
    %v63 = vlaneseq
    %v64 = vshrl.u32 %v63, 7
    %v65 = vsub.s32 %v62, %v64
    %v66 = vrot.slane %v45, %v65
    %v67 = vcombine.high %v66, %v66
    %70 = vrot.lane.b32.xlu0 %v66, 17
    %v71 = vpop.permute.xlu0 %70
    %72 = vrot.lane.b32.xlu0 %v67, 17
    %v73 = vpop.permute.xlu0 %72
    %vm74 = vcmp.lt.s32.totalorder %v47, 17
    %v75 = vsel %vm74, %v71, %v73
    %v76 = vsel %vm74, %v73, %v71
    %vm77 = vmand %vm51, %vm55
    %vm78 = vmand %vm52, %vm56
    %v79 = vsel %vm77, %v76, 0.0
    %v80 = vsel %vm78, %v75, 0.0
    %v81 = vstv %s35
    %v82 = vmul.f32 %v81, %v79
    %v83 = vmul.f32 %v81, %v80
    %v84 = vadd.f32 %v82, 0.0
    %v85 = vadd.f32 %v83, 0.0
    %86 = vrot.lane.b32.xlu0 %v66, 16
    %v87 = vpop.permute.xlu0 %86
    %88 = vrot.lane.b32.xlu0 %v67, 16
    %v89 = vpop.permute.xlu0 %88
    %vm90 = vcmp.lt.s32.totalorder %v47, 16
    %v91 = vsel %vm90, %v87, %v89
    %v92 = vsel %vm90, %v89, %v87
    %v93 = vsel %vm51, %v92, 0.0
    %v94 = vsel %vm52, %v91, 0.0
    %v95 = vstv %s36
    %v96 = vmul.f32 %v95, %v93
    %v97 = vmul.f32 %v95, %v94
    %v98 = vadd.f32 %v84, %v96
    %v99 = vadd.f32 %v85, %v97
    %100 = vrot.lane.b32.xlu0 %v66, 15
    %v101 = vpop.permute.xlu0 %100
    %102 = vrot.lane.b32.xlu0 %v67, 15
    %v103 = vpop.permute.xlu0 %102
    %vm104 = vcmp.lt.s32.totalorder %v47, 15
    %v105 = vsel %vm104, %v101, %v103
    %v106 = vsel %vm104, %v103, %v101
    %vm107 = vmand %vm51, %vm57
    %vm108 = vmand %vm52, %vm58
    %v109 = vsel %vm107, %v106, 0.0
    %v110 = vsel %vm108, %v105, 0.0
    %v111 = vstv %s37
    %v112 = vmul.f32 %v111, %v109
    %v113 = vmul.f32 %v111, %v110
    %v114 = vadd.f32 %v98, %v112
    %v115 = vadd.f32 %v99, %v113
    %116 = vrot.lane.b32.xlu0 %v66, 1
    %v117 = vpop.permute.xlu0 %116
    %118 = vrot.lane.b32.xlu0 %v67, 1
    %v119 = vpop.permute.xlu0 %118
    %vm120 = vcmp.lt.s32.totalorder %v47, 1
    %v121 = vsel %vm120, %v117, %v119
    %v122 = vsel %vm120, %v119, %v117
    %v123 = vsel %vm55, %v122, 0.0
    %v124 = vsel %vm56, %v121, 0.0
    %v125 = vstv %s38
    %v126 = vmul.f32 %v125, %v123
    %v127 = vmul.f32 %v125, %v124
    %v128 = vadd.f32 %v114, %v126
    %v129 = vadd.f32 %v115, %v127
    %v130 = vstv %s39
    %v131 = vmul.f32 %v130, %v45
    %v134 = vunpack.c.l.s4 1983009808
    %v135 = vunpack.c.0.s8 %v134
    %v136 = vlaneseq
    %v137 = vshrl.u32 %v136, 7
    %v138 = vsub.s32 %v135, %v137
    %v139 = vrot.slane %v131, %v138
    %v140 = vcombine.high %v139, %v139
    %v143 = vadd.f32 %v128, %v139
    %v144 = vadd.f32 %v129, %v140
    %145 = vrot.lane.b32.xlu0 %v66, 127
    %v146 = vpop.permute.xlu0 %145
    %147 = vrot.lane.b32.xlu0 %v67, 127
    %v148 = vpop.permute.xlu0 %147
    %vm149 = vcmp.lt.s32.totalorder %v47, 127
    %v150 = vsel %vm149, %v146, %v148
    %v151 = vsel %vm149, %v148, %v146
    %v152 = vsel %vm57, %v150, 0.0
    %v153 = vsel %vm58, %v151, 0.0
    %v154 = vstv %s40
    %v155 = vmul.f32 %v154, %v152
    %v156 = vmul.f32 %v154, %v153
    %v157 = vadd.f32 %v143, %v155
    %v158 = vadd.f32 %v144, %v156
    %159 = vrot.lane.b32.xlu0 %v66, 113
    %v160 = vpop.permute.xlu0 %159
    %161 = vrot.lane.b32.xlu0 %v67, 113
    %v162 = vpop.permute.xlu0 %161
    %vm163 = vcmp.lt.s32.totalorder %v47, 113
    %v164 = vsel %vm163, %v160, %v162
    %v165 = vsel %vm163, %v162, %v160
    %vm166 = vmand %vm53, %vm55
    %vm167 = vmand %vm54, %vm56
    %v168 = vsel %vm166, %v164, 0.0
    %v169 = vsel %vm167, %v165, 0.0
    %v170 = vstv %s41
    %v171 = vmul.f32 %v170, %v168
    %v172 = vmul.f32 %v170, %v169
    %v173 = vadd.f32 %v157, %v171
    %v174 = vadd.f32 %v158, %v172
    %175 = vrot.lane.b32.xlu0 %v66, 112
    %v176 = vpop.permute.xlu0 %175
    %177 = vrot.lane.b32.xlu0 %v67, 112
    %v178 = vpop.permute.xlu0 %177
    %vm179 = vcmp.lt.s32.totalorder %v47, 112
    %v180 = vsel %vm179, %v176, %v178
    %v181 = vsel %vm179, %v178, %v176
    %v182 = vsel %vm53, %v180, 0.0
    %v183 = vsel %vm54, %v181, 0.0
    %v184 = vstv %s42
    %v185 = vmul.f32 %v184, %v182
    %v186 = vmul.f32 %v184, %v183
    %v187 = vadd.f32 %v173, %v185
    %v188 = vadd.f32 %v174, %v186
    %189 = vrot.lane.b32.xlu0 %v66, 111
    %v190 = vpop.permute.xlu0 %189
    %191 = vrot.lane.b32.xlu0 %v67, 111
    %v192 = vpop.permute.xlu0 %191
    %vm193 = vcmp.lt.s32.totalorder %v47, 111
    %v194 = vsel %vm193, %v190, %v192
    %v195 = vsel %vm193, %v192, %v190
    %vm196 = vmand %vm53, %vm57
    %vm197 = vmand %vm54, %vm58
    %v198 = vsel %vm196, %v194, 0.0
    %v199 = vsel %vm197, %v195, 0.0
    %v200 = vstv %s43
    %v201 = vmul.f32 %v200, %v198
    %v202 = vmul.f32 %v200, %v199
    %v203 = vadd.f32 %v187, %v201
    %v204 = vadd.f32 %v188, %v202
    %v205 = vstv %s44
    %v206 = vadd.f32 %v203, %v205
    %v207 = vadd.f32 %v204, %v205
    %v210 = vcombine.low %v206, %v207
    %v212 = vunpack.c.l.s4 1983009808
    %v213 = vunpack.c.0.s8 %v212
    %v214 = vlaneseq
    %v215 = vshrl.u32 %v214, 7
    %v216 = vsub.s32 %v213, %v215
    %v217 = vrot.slane %v210, %v216
    %219 = vst [vmem:[#allocation7] sm:$0xf] %v217
    // Predicated region
    $region18: #{tpu_custom_call.1} parent=1 // pred_check
      _
    $region19: #{tpu_custom_call.1} parent=1 // pred_check_branch
      %221 = sbr.rel (0) target = $region21
    $region20: #{tpu_custom_call.1} parent=1 // pred_region
      %s223 = ssub.s32 64, 64
      %224 = vsyncadd [#allocation4], %s223
      %s226 = sshll.u32 [#allocation7], 4
      %s227 = int_to_ptr.vmem [resolvable:$true] %s226
      %229 = dma.vmem_to_hbm [thread:$0]  %s227, 64, %s2, [#allocation4]
    $region21: #{tpu_custom_call.1} parent=1 // pred_fallthru
      _
    // Predicated region
    $region22: #{tpu_custom_call.1} parent=1 // pred_check
      _
    $region23: #{tpu_custom_call.1} parent=1 // pred_check_branch
      %231 = sbr.rel (0) target = $region25
    $region24: #{tpu_custom_call.1} parent=1 // pred_region
      %232 = dma.done [#allocation4], 64
    $region25: #{tpu_custom_call.1} parent=1 // pred_fallthru
      _
    %233 = vsyncpa [#allocation3], 1
    %234 = vsyncpa [#allocation4], 1
    %235 = vsyncpa [#allocation5], 1

</llo_original>
